<compile_context>
chip_gen: v7x
topology: tpu7x:2x2x1
jax: 0.10.0
libtpu: 0.0.40
codegen_flags: <defaults>
</compile_context>

<pallas_src>
import numpy as np

import jax
import jax.numpy as jnp
from jax.experimental import pallas as pl
from jax.experimental.pallas import tpu as pltpu


def _round_up(n, m):
    return ((n + m - 1) // m) * m


def _cdiv(a, b):
    return -(-a // b)


# --------------------------------------------------------------------------- #
# Kernel
# --------------------------------------------------------------------------- #
def quadratic_kernel(x_ref, ai_ref, aj_ref, wg_ref, o_ref):
    """One row tile of the quadratic layer.

    x_ref : (tg, G*F)         f32   G logical rows packed per sublane row
    ai_ref: (G*F, G*F*F)      cdt   0/1 expansion matrix (selects x_i per lane)
    aj_ref: (G*F, G*F*F)      cdt   0/1 expansion matrix (selects x_j per lane)
    wg_ref: (G*F*F, out_lane) bf16  block-diagonal transposed weight
    o_ref : (tg, out_lane)    f32   G logical output rows packed per sublane row
    """
    cdt = ai_ref.dtype
    x = x_ref[...].astype(cdt)
    # Interleave done on the MXU (idle slot) instead of XLU repeat/tile
    # relayouts. Ai/Aj columns have exactly one 1 -> results are exact copies.
    xi = jnp.dot(x, ai_ref[...], preferred_element_type=jnp.float32).astype(cdt)
    xj = jnp.dot(x, aj_ref[...], preferred_element_type=jnp.float32).astype(cdt)
    # Flattened outer product, already lane-major: lane k (within its group
    # block) = x_i * x_j with i = k // F, j = k % F.
    outer = (xi * xj).astype(jnp.bfloat16)
    # Main matmul: bf16 operands, f32 accumulation on the MXU.
    y = jnp.dot(outer, wg_ref[...], preferred_element_type=jnp.float32)
    o_ref[...] = y.astype(o_ref.dtype)


# --------------------------------------------------------------------------- #
# Wrapper helpers
# --------------------------------------------------------------------------- #
def _device_tuning():
    """Per-generation compute dtype and scoped-VMEM budget."""
    try:
        kind = jax.devices()[0].device_kind.lower()
    except Exception:  # pragma: no cover - defensive
        kind = ""
    # bf16 VALU exists on v6e/v7x; keep f32 VPU math on v5e and older.
    old_gen = any(t in kind for t in ("v2", "v3", "v4", "v5"))
    compute_dtype = jnp.float32 if old_gen else jnp.bfloat16
    # 128 MiB physical VMEM parts can take a bigger scoped budget; v7x has
    # only 64 MiB physical, so stay conservative there (and for unknown parts).
    if any(t in kind for t in ("v4", "v5", "v6")):
        vmem_limit = 64 * 1024 * 1024
    else:
        vmem_limit = 40 * 1024 * 1024
    return compute_dtype, vmem_limit


def _pick_tile(n_rows, cap):
    """Largest multiple-of-8 tile <= cap minimizing row-padding waste."""
    cap = max(8, min(cap, _round_up(n_rows, 8)))
    cap = (cap // 8) * 8
    best_t = cap
    best_waste = _round_up(n_rows, cap) - n_rows
    t = cap - 8
    while t >= 8 and best_waste > 0:
        waste = _round_up(n_rows, t) - n_rows
        if waste < best_waste:
            best_t, best_waste = t, waste
        t -= 8
    return best_t


def _expansion_matrices(f, g, dtype):
    """0/1 matrices mapping grouped rows (G*F lanes) -> grouped outer (G*F*F)."""
    ff = f * f
    k = np.arange(g * ff)
    grp = k // ff
    i = (k % ff) // f
    j = (k % ff) % f
    ai = np.zeros((g * f, g * ff), dtype=np.float32)
    aj = np.zeros((g * f, g * ff), dtype=np.float32)
    ai[grp * f + i, k] = 1.0
    aj[grp * f + j, k] = 1.0
    return jnp.asarray(ai, dtype=dtype), jnp.asarray(aj, dtype=dtype)


def _pack_weight(w, f, out_f, g, out_lane):
    """Block-diagonal transposed weight: (G*F*F, out_lane) bf16."""
    ff = f * f
    wt = w.T.astype(jnp.bfloat16)                      # (FF, out_f)
    wg = jnp.zeros((g * ff, out_lane), dtype=jnp.bfloat16)
    for gi in range(g):                                # g is a small static int
        wg = wg.at[gi * ff:(gi + 1) * ff, gi * out_f:(gi + 1) * out_f].set(wt)
    return wg


# --------------------------------------------------------------------------- #
# Forward
# --------------------------------------------------------------------------- #
def quadratic_forward(x, w, *, compute_dtype=None, vmem_limit_bytes=None,
                      max_group_rows_per_tile=2048):
    """x: (B, D1, D2, F) float32, w: (out_features, F*F) float32."""
    B, D1, D2, F = x.shape
    out_f, FF = w.shape
    assert FF == F * F
    N = B * D1 * D2

    dflt_cdt, dflt_vmem = _device_tuning()
    cdt = dflt_cdt if compute_dtype is None else compute_dtype
    vmem_limit = dflt_vmem if vmem_limit_bytes is None else vmem_limit_bytes
    cdt_bytes = jnp.dtype(cdt).itemsize

    # ---- output packing: G logical rows per 128-lane output row -------------
    if 0 < out_f < 128 and 128 % out_f == 0:
        G = 128 // out_f
        out_lane = 128                        # fully dense 128-lane stores
    else:
        G = 1
        out_lane = _round_up(out_f, 128)      # lane-padded fallback

    # ---- constant / weight prep (fuses & caches under jit) ------------------
    ai, aj = _expansion_matrices(F, G, cdt)
    wg = _pack_weight(w, F, out_f, G, out_lane)

    # ---- row tiling: VMEM-budget-driven, waste-minimizing, grid >= 2 --------
    Ng = _cdiv(N, G)                                       # group-rows
    resident = ai.size * cdt_bytes + aj.size * cdt_bytes + wg.size * 2
    per_row = (2 * G * F * 4                               # double-buffered x tile
               + 3 * G * FF * cdt_bytes                    # xi / xj / outer temps
               + 2 * out_lane * 4)                         # double-buffered out tile
    budget_cap = max(8, (int(vmem_limit * 0.75) - resident) // per_row)
    cap = min(budget_cap, max_group_rows_per_tile)
    if Ng >= 16:                                           # keep >= 2 grid steps (v7x: 2 TCs)
        cap = min(cap, _round_up(_cdiv(Ng, 2), 8))
    tg = _pick_tile(Ng, cap)

    Ng_pad = _round_up(Ng, tg)
    R = Ng_pad * G                                         # padded logical rows
    xf = x.reshape(N, F)
    if R != N:
        xf = jnp.pad(xf, ((0, R - N), (0, 0)))
    xg = xf.reshape(Ng_pad, G * F)                         # grouped row layout

    flops = (2 * 2 * Ng_pad * (G * F) * (G * FF)           # expansion matmuls
             + Ng_pad * G * FF                             # elementwise multiply
             + 2 * Ng_pad * (G * FF) * out_lane)           # main matmul
    bytes_accessed = xg.size * 4 + resident + Ng_pad * out_lane * 4

    yg = pl.pallas_call(
        quadratic_kernel,
        out_shape=jax.ShapeDtypeStruct((Ng_pad, out_lane), jnp.float32),
        grid_spec=pltpu.PrefetchScalarGridSpec(
            num_scalar_prefetch=0,
            grid=(Ng_pad // tg,),
            in_specs=[
                pl.BlockSpec((tg, G * F), lambda i: (i, 0)),          # pipelined rows
                pl.BlockSpec(memory_space=pltpu.MemorySpace.VMEM),     # Ai (resident)
                pl.BlockSpec(memory_space=pltpu.MemorySpace.VMEM),     # Aj (resident)
                pl.BlockSpec(memory_space=pltpu.MemorySpace.VMEM),     # W  (resident)
            ],
            out_specs=pl.BlockSpec((tg, out_lane), lambda i: (i, 0)),
        ),
        compiler_params=pltpu.CompilerParams(
            dimension_semantics=("parallel",),
            vmem_limit_bytes=vmem_limit),
        cost_estimate=pl.CostEstimate(
            flops=flops, transcendentals=0, bytes_accessed=bytes_accessed),
    )(xg, ai, aj, wg)

    # Unpack the grouped output and strip row padding.
    if G > 1:
        yf = yg.reshape(R, out_f)          # (Ng_pad, G*out_f) -> (R, out_f), free
    else:
        yf = yg[:, :out_f]
    return yf[:N].reshape(B, D1, D2, out_f)


def quadratic_reference(x, w):
    """Pure-JAX f32 reference mirroring the PyTorch forward exactly."""
    B, D1, D2, f = x.shape
    xf = x.reshape(-1, f)
    outer = (xf[:, :, None] * xf[:, None, :]).reshape(-1, f * f)
    return (outer @ w.T).reshape(B, D1, D2, -1)


if __name__ == "__main__":
    key = jax.random.PRNGKey(0)
    kx, kw = jax.random.split(key)

    B, D1, D2 = 2, 4, 16
    in_features = 8
    out_features = 16

    x = jax.random.normal(kx, (B, D1, D2, in_features), dtype=jnp.float32)
    # The module's reset_parameters() uses std=0 (all-zero weight); use a small
    # deterministic nonzero weight so the numerical check is meaningful.
    w = 0.05 * jax.random.normal(
        kw, (out_features, in_features * in_features), dtype=jnp.float32)

    fwd = jax.jit(quadratic_forward)
    y = jax.block_until_ready(fwd(x, w))

    y_ref = quadratic_reference(x, w)
    assert y.shape == (B, D1, D2, out_features), y.shape
    # bf16 MXU operands (f32 accumulation) -> slightly looser tolerance vs the
    # pure-f32 reference.
    err = float(jnp.max(jnp.abs(y - y_ref)))
    assert jnp.allclose(y, y_ref, atol=5e-2, rtol=5e-2), f"max abs err = {err}"

    print("KERNEL_OK")
</pallas_src>

<mosaic_0001>
module attributes {stable_mosaic.version = 11 : i64} {
  func.func @quadratic_kernel(%arg0: i32, %arg1: memref<8x64xf32, #tpu.memory_space<vmem>>, %arg2: memref<64x512xbf16, #tpu.memory_space<vmem>>, %arg3: memref<64x512xbf16, #tpu.memory_space<vmem>>, %arg4: memref<512x128xbf16, #tpu.memory_space<vmem>>, %arg5: memref<8x128xf32, #tpu.memory_space<vmem>>) attributes {dimension_semantics = [#tpu.dimension_semantics<parallel>], iteration_bounds = array<i64: 2>, scalar_prefetch = 0 : i64, scratch_operands = 0 : i64, tpu.core_type = #tpu.core_type<tc>, window_params = [{transform_indices = @transform_0, window_bounds = array<i64: 8, 64>}, {pipeline_mode = #tpu.pipeline_mode<synchronous>, transform_indices = @transform_1, window_bounds = array<i64: 64, 512>}, {pipeline_mode = #tpu.pipeline_mode<synchronous>, transform_indices = @transform_2, window_bounds = array<i64: 64, 512>}, {pipeline_mode = #tpu.pipeline_mode<synchronous>, transform_indices = @transform_3, window_bounds = array<i64: 512, 128>}, {transform_indices = @transform_4, window_bounds = array<i64: 8, 128>}]} {
    %c0 = arith.constant 0 : index
    %c0_0 = arith.constant 0 : index
    %0 = vector.load %arg1[%c0, %c0_0] : memref<8x64xf32, #tpu.memory_space<vmem>>, vector<8x64xf32>
    %1 = arith.truncf %0 : vector<8x64xf32> to vector<8x64xbf16>
    %c0_1 = arith.constant 0 : index
    %c0_2 = arith.constant 0 : index
    %2 = vector.load %arg2[%c0_1, %c0_2] : memref<64x512xbf16, #tpu.memory_space<vmem>>, vector<64x512xbf16>
    %cst = arith.constant dense<0.000000e+00> : vector<8x512xf32>
    %3 = tpu.matmul %1, %2, %cst {dimension_numbers = #tpu.dot_dimension_numbers<[1], [0], [0], [1], [0, 0, 1, 1], [], []>} : vector<8x64xbf16>, vector<64x512xbf16>, vector<8x512xf32> -> vector<8x512xf32>
    %4 = arith.truncf %3 : vector<8x512xf32> to vector<8x512xbf16>
    %c0_3 = arith.constant 0 : index
    %c0_4 = arith.constant 0 : index
    %5 = vector.load %arg3[%c0_3, %c0_4] : memref<64x512xbf16, #tpu.memory_space<vmem>>, vector<64x512xbf16>
    %cst_5 = arith.constant dense<0.000000e+00> : vector<8x512xf32>
    %6 = tpu.matmul %1, %5, %cst_5 {dimension_numbers = #tpu.dot_dimension_numbers<[1], [0], [0], [1], [0, 0, 1, 1], [], []>} : vector<8x64xbf16>, vector<64x512xbf16>, vector<8x512xf32> -> vector<8x512xf32>
    %7 = arith.truncf %6 : vector<8x512xf32> to vector<8x512xbf16>
    %8 = arith.mulf %4, %7 : vector<8x512xbf16>
    %c0_6 = arith.constant 0 : index
    %c0_7 = arith.constant 0 : index
    %9 = vector.load %arg4[%c0_6, %c0_7] : memref<512x128xbf16, #tpu.memory_space<vmem>>, vector<512x128xbf16>
    %cst_8 = arith.constant dense<0.000000e+00> : vector<8x128xf32>
    %10 = tpu.matmul %8, %9, %cst_8 {dimension_numbers = #tpu.dot_dimension_numbers<[1], [0], [0], [1], [0, 0, 1, 1], [], []>} : vector<8x512xbf16>, vector<512x128xbf16>, vector<8x128xf32> -> vector<8x128xf32>
    %c0_9 = arith.constant 0 : index
    %c0_10 = arith.constant 0 : index
    %11 = vector.load %arg5[%c0_9, %c0_10] : memref<8x128xf32, #tpu.memory_space<vmem>>, vector<8x128xf32>
    tpu.vector_store %arg5[%c0_9, %c0_10], %10 {strides = array<i32>} : memref<8x128xf32, #tpu.memory_space<vmem>>, vector<8x128xf32>,
    return
  }
  func.func @transform_0(%arg0: i32) -> (i32, i32) {
    %c0_i32 = arith.constant 0 : i32
    %c0_i32_0 = arith.constant 0 : i32
    return %arg0, %c0_i32 : i32, i32
  }
  func.func @transform_1(%arg0: i32) -> (i32, i32) {
    %c0_i32 = arith.constant 0 : i32
    %c0_i32_0 = arith.constant 0 : i32
    %c0_i32_1 = arith.constant 0 : i32
    return %c0_i32, %c0_i32_0 : i32, i32
  }
  func.func @transform_2(%arg0: i32) -> (i32, i32) {
    %c0_i32 = arith.constant 0 : i32
    %c0_i32_0 = arith.constant 0 : i32
    %c0_i32_1 = arith.constant 0 : i32
    return %c0_i32, %c0_i32_0 : i32, i32
  }
  func.func @transform_3(%arg0: i32) -> (i32, i32) {
    %c0_i32 = arith.constant 0 : i32
    %c0_i32_0 = arith.constant 0 : i32
    %c0_i32_1 = arith.constant 0 : i32
    return %c0_i32, %c0_i32_0 : i32, i32
  }
  func.func @transform_4(%arg0: i32) -> (i32, i32) {
    %c0_i32 = arith.constant 0 : i32
    %c0_i32_0 = arith.constant 0 : i32
    return %arg0, %c0_i32 : i32, i32
  }
}

</mosaic_0001>

<llo_original>
// kernel: quadratic_forward.1
$region0: #{quadratic_forward.1}
  #allocation0 [shape = 'u32[]', space=smem, size = 0x4, offset = 0x4, fixed_abs, tag = 'smem constant byte address 0x4 - core index']
  #allocation1 [shape = 'u32[144,128]{1,0:T(1,128)}', space=vmem, size = 0x12000, scoped, tag = 'internal scratch']
  %s0 = inlined_call_operand.vmem [shape: f32[16,64], index: 0, kind: input, shape index: {}]
  %s1 = inlined_call_operand.vmem [shape: bf16[64,512], index: 1, kind: input, shape index: {}]
  %s2 = inlined_call_operand.vmem [shape: bf16[64,512], index: 2, kind: input, shape index: {}]
  %s3 = inlined_call_operand.vmem [shape: bf16[512,128], index: 3, kind: input, shape index: {}]
  %s4 = inlined_call_operand.vmem [shape: f32[16,128], index: 4, kind: output, shape index: {}]
  %s5 = sld [smem:[#allocation0]]
  $region49: #{quadratic_forward.1} parent=0
    _
  %s7 = ssub.s32 1, %s5
  %s8 = scalar_select 0, %s7, %s5
  loop: start=0, step=1, limit=4
  $region2: #{quadratic_forward.1} parent=0 // loop_pre_header
    _
  $region3: #{quadratic_forward.1} parent=0 // loop_header
    %s10 = sphi 0, %s14
    %p11 = scmp.ge.s32.totalorder %s10, 4
    %s20 = sphi 0, %s22
    %s23 = sphi 0, %s20
    %s24 = sphi 0, %s23
    %s40 = sphi 0, %s24
    %s44 = sphi 0, %s44
    %s46 = sphi 0, %s44
    %s47 = sphi 0, %s46
    %s61 = sphi 0, %s47
    %s65 = sphi 0, %s65
    %s67 = sphi 0, %s65
    %s68 = sphi 0, %s67
    %s82 = sphi 0, %s68
    %s86 = sphi 0, %s86
    %s88 = sphi 0, %s86
    %s89 = sphi 0, %s88
    %s103 = sphi 0, %s89
    %s109 = sphi 0, %s111
    %s112 = sphi 0, %s109
    %s113 = sphi 0, %s112
    %s129 = sphi 0, %s113
  $region4: #{quadratic_forward.1} parent=0 // loop_header_branch
    %13 = sbr.rel (%p11) target = $region8
  $region5: #{quadratic_forward.1} parent=0 // loop_body
    %s15 = ssub.s32 %s10, 1
    %s16 = ssub.s32 %s10, 2
    %s17 = sadd.s32 %s10, 1
    %s18 = ssub.s32 %s10, %s17
    %p19 = scmp.eq.s32.totalorder %s18, 0
    %s21 = sadd.s32 %s20, 1
    %s22 = scalar_select %p19, %s20, %s21
    %p25 = pneg %p19
    %p26 = scmp.eq.s32.totalorder %s10, 1
    %p27 = por %p25, %p26
    %p28 = scmp.ne.s32.totalorder %s20, %s23
    %p29 = scmp.eq.s32.totalorder %s10, 0
    %p30 = por %p28, %p29
    %p31 = scmp.ne.s32.totalorder %s20, %s23
    %p32 = scmp.eq.s32.totalorder %s15, 1
    %p33 = por %p31, %p32
    %p34 = scmp.ne.s32.totalorder %s23, %s24
    %p35 = scmp.eq.s32.totalorder %s15, 0
    %p36 = por %p34, %p35
    %p37 = scmp.ne.s32.totalorder %s23, %s24
    %p38 = scmp.eq.s32.totalorder %s16, 1
    %p39 = por %p37, %p38
    %p41 = scmp.ne.s32.totalorder %s24, %s40
    %p42 = scmp.eq.s32.totalorder %s16, 0
    %p43 = por %p41, %p42
    %s45 = sadd.s32 %s44, 1
    %p48 = scmp.eq.s32.totalorder %s10, 1
    %p49 = scmp.ne.s32.totalorder %s44, %s46
    %p50 = scmp.eq.s32.totalorder %s10, 0
    %p51 = por %p49, %p50
    %p52 = scmp.ne.s32.totalorder %s44, %s46
    %p53 = scmp.eq.s32.totalorder %s15, 1
    %p54 = por %p52, %p53
    %p55 = scmp.ne.s32.totalorder %s46, %s47
    %p56 = scmp.eq.s32.totalorder %s15, 0
    %p57 = por %p55, %p56
    %p58 = scmp.ne.s32.totalorder %s46, %s47
    %p59 = scmp.eq.s32.totalorder %s16, 1
    %p60 = por %p58, %p59
    %p62 = scmp.ne.s32.totalorder %s47, %s61
    %p63 = scmp.eq.s32.totalorder %s16, 0
    %p64 = por %p62, %p63
    %s66 = sadd.s32 %s65, 1
    %p69 = scmp.eq.s32.totalorder %s10, 1
    %p70 = scmp.ne.s32.totalorder %s65, %s67
    %p71 = scmp.eq.s32.totalorder %s10, 0
    %p72 = por %p70, %p71
    %p73 = scmp.ne.s32.totalorder %s65, %s67
    %p74 = scmp.eq.s32.totalorder %s15, 1
    %p75 = por %p73, %p74
    %p76 = scmp.ne.s32.totalorder %s67, %s68
    %p77 = scmp.eq.s32.totalorder %s15, 0
    %p78 = por %p76, %p77
    %p79 = scmp.ne.s32.totalorder %s67, %s68
    %p80 = scmp.eq.s32.totalorder %s16, 1
    %p81 = por %p79, %p80
    %p83 = scmp.ne.s32.totalorder %s68, %s82
    %p84 = scmp.eq.s32.totalorder %s16, 0
    %p85 = por %p83, %p84
    %s87 = sadd.s32 %s86, 1
    %p90 = scmp.eq.s32.totalorder %s10, 1
    %p91 = scmp.ne.s32.totalorder %s86, %s88
    %p92 = scmp.eq.s32.totalorder %s10, 0
    %p93 = por %p91, %p92
    %p94 = scmp.ne.s32.totalorder %s86, %s88
    %p95 = scmp.eq.s32.totalorder %s15, 1
    %p96 = por %p94, %p95
    %p97 = scmp.ne.s32.totalorder %s88, %s89
    %p98 = scmp.eq.s32.totalorder %s15, 0
    %p99 = por %p97, %p98
    %p100 = scmp.ne.s32.totalorder %s88, %s89
    %p101 = scmp.eq.s32.totalorder %s16, 1
    %p102 = por %p100, %p101
    %p104 = scmp.ne.s32.totalorder %s89, %s103
    %p105 = scmp.eq.s32.totalorder %s16, 0
    %p106 = por %p104, %p105
    %s107 = ssub.s32 %s10, %s17
    %p108 = scmp.eq.s32.totalorder %s107, 0
    %s110 = sadd.s32 %s109, 1
    %s111 = scalar_select %p108, %s109, %s110
    %p114 = pneg %p108
    %p115 = scmp.eq.s32.totalorder %s10, 1
    %p116 = por %p114, %p115
    %p117 = scmp.ne.s32.totalorder %s109, %s112
    %p118 = scmp.eq.s32.totalorder %s10, 0
    %p119 = por %p117, %p118
    %p120 = scmp.ne.s32.totalorder %s109, %s112
    %p121 = scmp.eq.s32.totalorder %s15, 1
    %p122 = por %p120, %p121
    %p123 = scmp.ne.s32.totalorder %s112, %s113
    %p124 = scmp.eq.s32.totalorder %s15, 0
    %p125 = por %p123, %p124
    %p126 = scmp.ne.s32.totalorder %s112, %s113
    %p127 = scmp.eq.s32.totalorder %s16, 1
    %p128 = por %p126, %p127
    %p130 = scmp.ne.s32.totalorder %s113, %s129
    %p131 = scmp.eq.s32.totalorder %s16, 0
    %p132 = por %p130, %p131
    %p133 = scmp.le.s32.totalorder 1, %s10
    %p134 = scmp.lt.s32.totalorder %s10, 3
    %p135 = pnand %p133, %p134
    %p136 = pneg %p135
    // Predicated region
    $region9: #{quadratic_forward.1} parent=5 // pred_check
      _
    $region10: #{quadratic_forward.1} parent=5 // pred_check_branch
      %138 = sbr.rel (%p135) target = $region12
    $region11: #{quadratic_forward.1} parent=5 // pred_region
      %s139 = ssub.s32 %s10, 1
      // Predicated region
      $region13: #{quadratic_forward.1} parent=11 // pred_check
        %p140 = pneg %p57
      $region14: #{quadratic_forward.1} parent=11 // pred_check_branch
        %142 = sbr.rel (%p140) target = $region16
      $region15: #{quadratic_forward.1} parent=11 // pred_region
        _
      $region16: #{quadratic_forward.1} parent=11 // pred_fallthru
        _
      // Predicated region
      $region17: #{quadratic_forward.1} parent=11 // pred_check
        %p143 = pneg %p78
      $region18: #{quadratic_forward.1} parent=11 // pred_check_branch
        %145 = sbr.rel (%p143) target = $region20
      $region19: #{quadratic_forward.1} parent=11 // pred_region
        _
      $region20: #{quadratic_forward.1} parent=11 // pred_fallthru
        _
      // Predicated region
      $region21: #{quadratic_forward.1} parent=11 // pred_check
        %p146 = pneg %p99
      $region22: #{quadratic_forward.1} parent=11 // pred_check_branch
        %148 = sbr.rel (%p146) target = $region24
      $region23: #{quadratic_forward.1} parent=11 // pred_region
        _
      $region24: #{quadratic_forward.1} parent=11 // pred_fallthru
        _
    $region12: #{quadratic_forward.1} parent=5 // pred_fallthru
      _
    %p149 = scmp.lt.s32.totalorder %s10, 2
    // Predicated region
    $region25: #{quadratic_forward.1} parent=5 // pred_check
      %p150 = pneg %p149
    $region26: #{quadratic_forward.1} parent=5 // pred_check_branch
      %152 = sbr.rel (%p150) target = $region28
    $region27: #{quadratic_forward.1} parent=5 // pred_region
      // Predicated region
      $region29: #{quadratic_forward.1} parent=27 // pred_check
        %p153 = pneg %p30
      $region30: #{quadratic_forward.1} parent=27 // pred_check_branch
        %155 = sbr.rel (%p153) target = $region32
      $region31: #{quadratic_forward.1} parent=27 // pred_region
        %p156 = scmp.lt.s32.totalorder %s10, 1
        %s157 = scalar_select %p156, %s10, 1
        %s158 = smul.addr %s157, 8
        %s159 = scalar_lea.vmem %s0, %s158
      $region32: #{quadratic_forward.1} parent=27 // pred_fallthru
        _
    $region28: #{quadratic_forward.1} parent=5 // pred_fallthru
      _
    %p160 = scmp.le.s32.totalorder 1, %s10
    %p161 = scmp.lt.s32.totalorder %s10, 3
    %p162 = pnand %p160, %p161
    %p163 = pneg %p162
    // Predicated region
    $region33: #{quadratic_forward.1} parent=5 // pred_check
      _
    $region34: #{quadratic_forward.1} parent=5 // pred_check_branch
      %165 = sbr.rel (%p162) target = $region36
    $region35: #{quadratic_forward.1} parent=5 // pred_region
      %s166 = ssub.s32 %s10, 1
      %p167 = scmp.lt.s32.totalorder %s15, 1
      %s168 = scalar_select %p167, %s15, 1
      %s169 = smul.addr %s168, 8
      %s170 = scalar_lea.vmem %s0, %s169
      %p171 = pneg %p36
      %p172 = pneg %p33
      %p173 = pneg %p57
      %p174 = pneg %p54
      %p175 = pneg %p78
      %p176 = pneg %p75
      %p177 = pneg %p99
      %p178 = pneg %p96
      %p179 = pneg %p125
      %p180 = pneg %p122
      %p181 = scmp.lt.s32.totalorder %s15, 1
      %s182 = scalar_select %p181, %s15, 1
      %s183 = smul.addr %s182, 8
      %s184 = scalar_lea.vmem %s4, %s183
      %p185 = scmp.lt.s32.totalorder %s15, 1
      %s186 = scalar_select %p185, %s15, 1
      %s187 = smul.addr %s186, 8
      %s188 = scalar_lea.vmem %s0, %s187
      %p189 = scmp.lt.s32.totalorder %s15, 1
      %s190 = scalar_select %p189, %s15, 1
      %s191 = smul.addr %s190, 8
      %s192 = scalar_lea.vmem %s4, %s191
      %v194 = vld [vmem:[%s188] sm:$0xff]
      %v195 = vpack.c.bf16 %v194, %v194
      %v196 = vld [vmem:[%s1] sm:$0xff]
      %v197 = vld [vmem:[%s1 + $0x8] sm:$0xff]
      %v198 = vld [vmem:[%s1 + $0x10] sm:$0xff]
      %v199 = vld [vmem:[%s1 + $0x18] sm:$0xff]
      %v200 = vld [vmem:[%s1 + $0x20] sm:$0xff]
      %v201 = vld [vmem:[%s1 + $0x28] sm:$0xff]
      %v202 = vld [vmem:[%s1 + $0x30] sm:$0xff]
      %v203 = vld [vmem:[%s1 + $0x38] sm:$0xff]
      %v204 = vld [vmem:[%s1 + $0x40] sm:$0xff]
      %v205 = vld [vmem:[%s1 + $0x48] sm:$0xff]
      %v206 = vld [vmem:[%s1 + $0x50] sm:$0xff]
      %v207 = vld [vmem:[%s1 + $0x58] sm:$0xff]
      %v208 = vld [vmem:[%s1 + $0x60] sm:$0xff]
      %v209 = vld [vmem:[%s1 + $0x68] sm:$0xff]
      %v210 = vld [vmem:[%s1 + $0x70] sm:$0xff]
      %v211 = vld [vmem:[%s1 + $0x78] sm:$0xff]
      %v228 = vunpack.c.l.b16 %v196
      %v229 = vunpack.c.h.b16 %v196
      %v230 = vunpack.c.l.b16 %v197
      %v231 = vunpack.c.h.b16 %v197
      %v232 = vunpack.c.l.b16 %v198
      %v233 = vunpack.c.h.b16 %v198
      %v234 = vunpack.c.l.b16 %v199
      %v235 = vunpack.c.h.b16 %v199
      %v236 = vunpack.c.l.b16 %v200
      %v237 = vunpack.c.h.b16 %v200
      %v238 = vunpack.c.l.b16 %v201
      %v239 = vunpack.c.h.b16 %v201
      %v240 = vunpack.c.l.b16 %v202
      %v241 = vunpack.c.h.b16 %v202
      %v242 = vunpack.c.l.b16 %v203
      %v243 = vunpack.c.h.b16 %v203
      %v244 = vunpack.c.l.b16 %v204
      %v245 = vunpack.c.h.b16 %v204
      %v246 = vunpack.c.l.b16 %v205
      %v247 = vunpack.c.h.b16 %v205
      %v248 = vunpack.c.l.b16 %v206
      %v249 = vunpack.c.h.b16 %v206
      %v250 = vunpack.c.l.b16 %v207
      %v251 = vunpack.c.h.b16 %v207
      %v252 = vunpack.c.l.b16 %v208
      %v253 = vunpack.c.h.b16 %v208
      %v254 = vunpack.c.l.b16 %v209
      %v255 = vunpack.c.h.b16 %v209
      %v256 = vunpack.c.l.b16 %v210
      %v257 = vunpack.c.h.b16 %v210
      %v258 = vunpack.c.l.b16 %v211
      %v259 = vunpack.c.h.b16 %v211
      %v260 = vpack.c.b16 %v232, %v228
      %v261 = vpack.c.b16 %v233, %v229
      %v262 = vpack.c.b16 %v234, %v230
      %v263 = vpack.c.b16 %v235, %v231
      %v264 = vpack.c.b16 %v240, %v236
      %v265 = vpack.c.b16 %v241, %v237
      %v266 = vpack.c.b16 %v242, %v238
      %v267 = vpack.c.b16 %v243, %v239
      %v268 = vpack.c.b16 %v248, %v244
      %v269 = vpack.c.b16 %v249, %v245
      %v270 = vpack.c.b16 %v250, %v246
      %v271 = vpack.c.b16 %v251, %v247
      %v272 = vpack.c.b16 %v256, %v252
      %v273 = vpack.c.b16 %v257, %v253
      %v274 = vpack.c.b16 %v258, %v254
      %v275 = vpack.c.b16 %v259, %v255
      %vm292 = vcmask 523264
      %v294 = vsel %vm292, %v195, 0
      %296 = vmatprep.subr.bf16.mxu0 %v261
      %297 = vmatpush1.bf16.msra.mxu0 %v260
      %298 = vmatprep.subr.bf16.mxu0 %v265
      %299 = vmatpush1.bf16.msra.mxu0 %v264
      %300 = vmatprep.subr.bf16.mxu0 %v269
      %301 = vmatpush1.bf16.msra.mxu0 %v268
      %302 = vmatprep.subr.bf16.mxu0 %v273
      %303 = vmatpush1.bf16.msra.mxu0 %v272
      %304 = vmatprep.subr.bf16.mxu0 0
      %305 = vmatpush1.bf16.msra.mxu0 0
      %306 = vmatprep.subr.bf16.mxu0 0
      %307 = vmatpush1.bf16.msra.mxu0 0
      %308 = vmatprep.subr.bf16.mxu0 0
      %309 = vmatpush1.bf16.msra.mxu0 0
      %310 = vmatprep.subr.bf16.mxu0 0
      %311 = vmatpush1.bf16.msra.mxu0 0
      %312 = vmatprep.subr.bf16.mxu0 0
      %313 = vmatpush1.bf16.msra.mxu0 0
      %314 = vmatprep.subr.bf16.mxu0 0
      %315 = vmatpush1.bf16.msra.mxu0 0
      %316 = vmatprep.subr.bf16.mxu0 0
      %317 = vmatpush1.bf16.msra.mxu0 0
      %318 = vmatprep.subr.bf16.mxu0 0
      %319 = vmatpush1.bf16.msra.mxu0 0
      %320 = vmatprep.subr.bf16.mxu0 0
      %321 = vmatpush1.bf16.msra.mxu0 0
      %322 = vmatprep.subr.bf16.mxu0 0
      %323 = vmatpush1.bf16.msra.mxu0 0
      %324 = vmatprep.subr.bf16.mxu0 0
      %325 = vmatpush1.bf16.msra.mxu0 0
      %326 = vmatprep.subr.bf16.mxu0 0
      %327 = vmatpush1.bf16.msra.mxu0 0
      %328 = vmatprep.mubr.bf16.mxu0 0
      %329 = vmatmul.mubr.bf16.gmra.mrb[0].mxu0 %v294
      %v330 = vpop.f32.mrb[0].mxu0
      %v331 = vadd.f32 0.0, %v330
      %v332 = vpop.f32.mrb[0].mxu0
      %v333 = vadd.f32 0.0, %v332
      %v334 = vpop.f32.mrb[0].mxu0
      %v335 = vpop.f32.mrb[0].mxu0
      %336 = vdwg.mxu0
      %337 = vmatprep.subr.bf16.mxu0 %v263
      %338 = vmatpush1.bf16.msra.mxu0 %v262
      %339 = vmatprep.subr.bf16.mxu0 %v267
      %340 = vmatpush1.bf16.msra.mxu0 %v266
      %341 = vmatprep.subr.bf16.mxu0 %v271
      %342 = vmatpush1.bf16.msra.mxu0 %v270
      %343 = vmatprep.subr.bf16.mxu0 %v275
      %344 = vmatpush1.bf16.msra.mxu0 %v274
      %345 = vmatprep.subr.bf16.mxu0 0
      %346 = vmatpush1.bf16.msra.mxu0 0
      %347 = vmatprep.subr.bf16.mxu0 0
      %348 = vmatpush1.bf16.msra.mxu0 0
      %349 = vmatprep.subr.bf16.mxu0 0
      %350 = vmatpush1.bf16.msra.mxu0 0
      %351 = vmatprep.subr.bf16.mxu0 0
      %352 = vmatpush1.bf16.msra.mxu0 0
      %353 = vmatprep.subr.bf16.mxu0 0
      %354 = vmatpush1.bf16.msra.mxu0 0
      %355 = vmatprep.subr.bf16.mxu0 0
      %356 = vmatpush1.bf16.msra.mxu0 0
      %357 = vmatprep.subr.bf16.mxu0 0
      %358 = vmatpush1.bf16.msra.mxu0 0
      %359 = vmatprep.subr.bf16.mxu0 0
      %360 = vmatpush1.bf16.msra.mxu0 0
      %361 = vmatprep.subr.bf16.mxu0 0
      %362 = vmatpush1.bf16.msra.mxu0 0
      %363 = vmatprep.subr.bf16.mxu0 0
      %364 = vmatpush1.bf16.msra.mxu0 0
      %365 = vmatprep.subr.bf16.mxu0 0
      %366 = vmatpush1.bf16.msra.mxu0 0
      %367 = vmatprep.subr.bf16.mxu0 0
      %368 = vmatpush1.bf16.msra.mxu0 0
      %369 = vmatprep.mubr.bf16.mxu0 0
      %370 = vmatmul.mubr.bf16.gmra.mrb[0].mxu0 %v294
      %v371 = vpop.f32.mrb[0].mxu0
      %v372 = vadd.f32 0.0, %v371
      %v373 = vpop.f32.mrb[0].mxu0
      %v374 = vadd.f32 0.0, %v373
      %v375 = vpop.f32.mrb[0].mxu0
      %v376 = vpop.f32.mrb[0].mxu0
      %377 = vdwg.mxu0
      %v378 = vpack.c.bf16 %v331, %v331
      %v379 = vpack.c.bf16 %v333, %v333
      %v380 = vpack.c.bf16 %v372, %v372
      %v381 = vpack.c.bf16 %v374, %v374
      %v382 = vld [vmem:[%s2] sm:$0xff]
      %v383 = vld [vmem:[%s2 + $0x8] sm:$0xff]
      %v384 = vld [vmem:[%s2 + $0x10] sm:$0xff]
      %v385 = vld [vmem:[%s2 + $0x18] sm:$0xff]
      %v386 = vld [vmem:[%s2 + $0x20] sm:$0xff]
      %v387 = vld [vmem:[%s2 + $0x28] sm:$0xff]
      %v388 = vld [vmem:[%s2 + $0x30] sm:$0xff]
      %v389 = vld [vmem:[%s2 + $0x38] sm:$0xff]
      %v390 = vld [vmem:[%s2 + $0x40] sm:$0xff]
      %v391 = vld [vmem:[%s2 + $0x48] sm:$0xff]
      %v392 = vld [vmem:[%s2 + $0x50] sm:$0xff]
      %v393 = vld [vmem:[%s2 + $0x58] sm:$0xff]
      %v394 = vld [vmem:[%s2 + $0x60] sm:$0xff]
      %v395 = vld [vmem:[%s2 + $0x68] sm:$0xff]
      %v396 = vld [vmem:[%s2 + $0x70] sm:$0xff]
      %v397 = vld [vmem:[%s2 + $0x78] sm:$0xff]
      %v414 = vunpack.c.l.b16 %v382
      %v415 = vunpack.c.h.b16 %v382
      %v416 = vunpack.c.l.b16 %v383
      %v417 = vunpack.c.h.b16 %v383
      %v418 = vunpack.c.l.b16 %v384
      %v419 = vunpack.c.h.b16 %v384
      %v420 = vunpack.c.l.b16 %v385
      %v421 = vunpack.c.h.b16 %v385
      %v422 = vunpack.c.l.b16 %v386
      %v423 = vunpack.c.h.b16 %v386
      %v424 = vunpack.c.l.b16 %v387
      %v425 = vunpack.c.h.b16 %v387
      %v426 = vunpack.c.l.b16 %v388
      %v427 = vunpack.c.h.b16 %v388
      %v428 = vunpack.c.l.b16 %v389
      %v429 = vunpack.c.h.b16 %v389
      %v430 = vunpack.c.l.b16 %v390
      %v431 = vunpack.c.h.b16 %v390
      %v432 = vunpack.c.l.b16 %v391
      %v433 = vunpack.c.h.b16 %v391
      %v434 = vunpack.c.l.b16 %v392
      %v435 = vunpack.c.h.b16 %v392
      %v436 = vunpack.c.l.b16 %v393
      %v437 = vunpack.c.h.b16 %v393
      %v438 = vunpack.c.l.b16 %v394
      %v439 = vunpack.c.h.b16 %v394
      %v440 = vunpack.c.l.b16 %v395
      %v441 = vunpack.c.h.b16 %v395
      %v442 = vunpack.c.l.b16 %v396
      %v443 = vunpack.c.h.b16 %v396
      %v444 = vunpack.c.l.b16 %v397
      %v445 = vunpack.c.h.b16 %v397
      %v446 = vpack.c.b16 %v418, %v414
      %v447 = vpack.c.b16 %v419, %v415
      %v448 = vpack.c.b16 %v420, %v416
      %v449 = vpack.c.b16 %v421, %v417
      %v450 = vpack.c.b16 %v426, %v422
      %v451 = vpack.c.b16 %v427, %v423
      %v452 = vpack.c.b16 %v428, %v424
      %v453 = vpack.c.b16 %v429, %v425
      %v454 = vpack.c.b16 %v434, %v430
      %v455 = vpack.c.b16 %v435, %v431
      %v456 = vpack.c.b16 %v436, %v432
      %v457 = vpack.c.b16 %v437, %v433
      %v458 = vpack.c.b16 %v442, %v438
      %v459 = vpack.c.b16 %v443, %v439
      %v460 = vpack.c.b16 %v444, %v440
      %v461 = vpack.c.b16 %v445, %v441
      %478 = vmatprep.subr.bf16.mxu0 %v447
      %479 = vmatpush1.bf16.msra.mxu0 %v446
      %480 = vmatprep.subr.bf16.mxu0 %v451
      %481 = vmatpush1.bf16.msra.mxu0 %v450
      %482 = vmatprep.subr.bf16.mxu0 %v455
      %483 = vmatpush1.bf16.msra.mxu0 %v454
      %484 = vmatprep.subr.bf16.mxu0 %v459
      %485 = vmatpush1.bf16.msra.mxu0 %v458
      %486 = vmatprep.subr.bf16.mxu0 0
      %487 = vmatpush1.bf16.msra.mxu0 0
      %488 = vmatprep.subr.bf16.mxu0 0
      %489 = vmatpush1.bf16.msra.mxu0 0
      %490 = vmatprep.subr.bf16.mxu0 0
      %491 = vmatpush1.bf16.msra.mxu0 0
      %492 = vmatprep.subr.bf16.mxu0 0
      %493 = vmatpush1.bf16.msra.mxu0 0
      %494 = vmatprep.subr.bf16.mxu0 0
      %495 = vmatpush1.bf16.msra.mxu0 0
      %496 = vmatprep.subr.bf16.mxu0 0
      %497 = vmatpush1.bf16.msra.mxu0 0
      %498 = vmatprep.subr.bf16.mxu0 0
      %499 = vmatpush1.bf16.msra.mxu0 0
      %500 = vmatprep.subr.bf16.mxu0 0
      %501 = vmatpush1.bf16.msra.mxu0 0
      %502 = vmatprep.subr.bf16.mxu0 0
      %503 = vmatpush1.bf16.msra.mxu0 0
      %504 = vmatprep.subr.bf16.mxu0 0
      %505 = vmatpush1.bf16.msra.mxu0 0
      %506 = vmatprep.subr.bf16.mxu0 0
      %507 = vmatpush1.bf16.msra.mxu0 0
      %508 = vmatprep.subr.bf16.mxu0 0
      %509 = vmatpush1.bf16.msra.mxu0 0
      %510 = vmatprep.mubr.bf16.mxu0 0
      %511 = vmatmul.mubr.bf16.gmra.mrb[0].mxu0 %v294
      %v512 = vpop.f32.mrb[0].mxu0
      %v513 = vadd.f32 0.0, %v512
      %v514 = vpop.f32.mrb[0].mxu0
      %v515 = vadd.f32 0.0, %v514
      %v516 = vpop.f32.mrb[0].mxu0
      %v517 = vpop.f32.mrb[0].mxu0
      %518 = vdwg.mxu0
      %519 = vmatprep.subr.bf16.mxu0 %v449
      %520 = vmatpush1.bf16.msra.mxu0 %v448
      %521 = vmatprep.subr.bf16.mxu0 %v453
      %522 = vmatpush1.bf16.msra.mxu0 %v452
      %523 = vmatprep.subr.bf16.mxu0 %v457
      %524 = vmatpush1.bf16.msra.mxu0 %v456
      %525 = vmatprep.subr.bf16.mxu0 %v461
      %526 = vmatpush1.bf16.msra.mxu0 %v460
      %527 = vmatprep.subr.bf16.mxu0 0
      %528 = vmatpush1.bf16.msra.mxu0 0
      %529 = vmatprep.subr.bf16.mxu0 0
      %530 = vmatpush1.bf16.msra.mxu0 0
      %531 = vmatprep.subr.bf16.mxu0 0
      %532 = vmatpush1.bf16.msra.mxu0 0
      %533 = vmatprep.subr.bf16.mxu0 0
      %534 = vmatpush1.bf16.msra.mxu0 0
      %535 = vmatprep.subr.bf16.mxu0 0
      %536 = vmatpush1.bf16.msra.mxu0 0
      %537 = vmatprep.subr.bf16.mxu0 0
      %538 = vmatpush1.bf16.msra.mxu0 0
      %539 = vmatprep.subr.bf16.mxu0 0
      %540 = vmatpush1.bf16.msra.mxu0 0
      %541 = vmatprep.subr.bf16.mxu0 0
      %542 = vmatpush1.bf16.msra.mxu0 0
      %543 = vmatprep.subr.bf16.mxu0 0
      %544 = vmatpush1.bf16.msra.mxu0 0
      %545 = vmatprep.subr.bf16.mxu0 0
      %546 = vmatpush1.bf16.msra.mxu0 0
      %547 = vmatprep.subr.bf16.mxu0 0
      %548 = vmatpush1.bf16.msra.mxu0 0
      %549 = vmatprep.subr.bf16.mxu0 0
      %550 = vmatpush1.bf16.msra.mxu0 0
      %551 = vmatprep.mubr.bf16.mxu0 0
      %552 = vmatmul.mubr.bf16.gmra.mrb[0].mxu0 %v294
      %v553 = vpop.f32.mrb[0].mxu0
      %v554 = vadd.f32 0.0, %v553
      %v555 = vpop.f32.mrb[0].mxu0
      %v556 = vadd.f32 0.0, %v555
      %v557 = vpop.f32.mrb[0].mxu0
      %v558 = vpop.f32.mrb[0].mxu0
      %559 = vdwg.mxu0
      %v560 = vpack.c.bf16 %v513, %v513
      %v561 = vpack.c.bf16 %v515, %v515
      %v562 = vpack.c.bf16 %v554, %v554
      %v563 = vpack.c.bf16 %v556, %v556
      %v564 = vmul.bf16 %v378, %v560
      %v565 = vmul.bf16 %v379, %v561
      %v566 = vmul.bf16 %v380, %v562
      %v567 = vmul.bf16 %v381, %v563
      %v568 = vld [vmem:[%s3] sm:$0xf]
      %v569 = vld [vmem:[%s3 + $0x4] sm:$0xf]
      %v570 = vld [vmem:[%s3 + $0x8] sm:$0xf]
      %v571 = vld [vmem:[%s3 + $0xc] sm:$0xf]
      %v572 = vld [vmem:[%s3 + $0x10] sm:$0xf]
      %v573 = vld [vmem:[%s3 + $0x14] sm:$0xf]
      %v574 = vld [vmem:[%s3 + $0x18] sm:$0xf]
      %v575 = vld [vmem:[%s3 + $0x1c] sm:$0xf]
      %v576 = vld [vmem:[%s3 + $0x20] sm:$0xf]
      %v577 = vld [vmem:[%s3 + $0x24] sm:$0xf]
      %v578 = vld [vmem:[%s3 + $0x28] sm:$0xf]
      %v579 = vld [vmem:[%s3 + $0x2c] sm:$0xf]
      %v580 = vld [vmem:[%s3 + $0x30] sm:$0xf]
      %v581 = vld [vmem:[%s3 + $0x34] sm:$0xf]
      %v582 = vld [vmem:[%s3 + $0x38] sm:$0xf]
      %v583 = vld [vmem:[%s3 + $0x3c] sm:$0xf]
      %v584 = vld [vmem:[%s3 + $0x40] sm:$0xf]
      %v585 = vld [vmem:[%s3 + $0x44] sm:$0xf]
      %v586 = vld [vmem:[%s3 + $0x48] sm:$0xf]
      %v587 = vld [vmem:[%s3 + $0x4c] sm:$0xf]
      %v588 = vld [vmem:[%s3 + $0x50] sm:$0xf]
      %v589 = vld [vmem:[%s3 + $0x54] sm:$0xf]
      %v590 = vld [vmem:[%s3 + $0x58] sm:$0xf]
      %v591 = vld [vmem:[%s3 + $0x5c] sm:$0xf]
      %v592 = vld [vmem:[%s3 + $0x60] sm:$0xf]
      %v593 = vld [vmem:[%s3 + $0x64] sm:$0xf]
      %v594 = vld [vmem:[%s3 + $0x68] sm:$0xf]
      %v595 = vld [vmem:[%s3 + $0x6c] sm:$0xf]
      %v596 = vld [vmem:[%s3 + $0x70] sm:$0xf]
      %v597 = vld [vmem:[%s3 + $0x74] sm:$0xf]
      %v598 = vld [vmem:[%s3 + $0x78] sm:$0xf]
      %v599 = vld [vmem:[%s3 + $0x7c] sm:$0xf]
      %v600 = vld [vmem:[%s3 + $0x80] sm:$0xf]
      %v601 = vld [vmem:[%s3 + $0x84] sm:$0xf]
      %v602 = vld [vmem:[%s3 + $0x88] sm:$0xf]
      %v603 = vld [vmem:[%s3 + $0x8c] sm:$0xf]
      %v604 = vld [vmem:[%s3 + $0x90] sm:$0xf]
      %v605 = vld [vmem:[%s3 + $0x94] sm:$0xf]
      %v606 = vld [vmem:[%s3 + $0x98] sm:$0xf]
      %v607 = vld [vmem:[%s3 + $0x9c] sm:$0xf]
      %v608 = vld [vmem:[%s3 + $0xa0] sm:$0xf]
      %v609 = vld [vmem:[%s3 + $0xa4] sm:$0xf]
      %v610 = vld [vmem:[%s3 + $0xa8] sm:$0xf]
      %v611 = vld [vmem:[%s3 + $0xac] sm:$0xf]
      %v612 = vld [vmem:[%s3 + $0xb0] sm:$0xf]
      %v613 = vld [vmem:[%s3 + $0xb4] sm:$0xf]
      %v614 = vld [vmem:[%s3 + $0xb8] sm:$0xf]
      %v615 = vld [vmem:[%s3 + $0xbc] sm:$0xf]
      %v616 = vld [vmem:[%s3 + $0xc0] sm:$0xf]
      %v617 = vld [vmem:[%s3 + $0xc4] sm:$0xf]
      %v618 = vld [vmem:[%s3 + $0xc8] sm:$0xf]
      %v619 = vld [vmem:[%s3 + $0xcc] sm:$0xf]
      %v620 = vld [vmem:[%s3 + $0xd0] sm:$0xf]
      %v621 = vld [vmem:[%s3 + $0xd4] sm:$0xf]
      %v622 = vld [vmem:[%s3 + $0xd8] sm:$0xf]
      %v623 = vld [vmem:[%s3 + $0xdc] sm:$0xf]
      %v624 = vld [vmem:[%s3 + $0xe0] sm:$0xf]
      %v625 = vld [vmem:[%s3 + $0xe4] sm:$0xf]
      %v626 = vld [vmem:[%s3 + $0xe8] sm:$0xf]
      %v627 = vld [vmem:[%s3 + $0xec] sm:$0xf]
      %v628 = vld [vmem:[%s3 + $0xf0] sm:$0xf]
      %v629 = vld [vmem:[%s3 + $0xf4] sm:$0xf]
      %v630 = vld [vmem:[%s3 + $0xf8] sm:$0xf]
      %v631 = vld [vmem:[%s3 + $0xfc] sm:$0xf]
      %v696 = vunpack.c.l.b16 %v568
      %v697 = vunpack.c.l.b16 %v569
      %v698 = vunpack.c.l.b16 %v570
      %v699 = vunpack.c.l.b16 %v571
      %v700 = vunpack.c.l.b16 %v572
      %v701 = vunpack.c.l.b16 %v573
      %v702 = vunpack.c.l.b16 %v574
      %v703 = vunpack.c.l.b16 %v575
      %v704 = vunpack.c.l.b16 %v576
      %v705 = vunpack.c.l.b16 %v577
      %v706 = vunpack.c.l.b16 %v578
      %v707 = vunpack.c.l.b16 %v579
      %v708 = vunpack.c.l.b16 %v580
      %v709 = vunpack.c.l.b16 %v581
      %v710 = vunpack.c.l.b16 %v582
      %v711 = vunpack.c.l.b16 %v583
      %v712 = vunpack.c.l.b16 %v584
      %v713 = vunpack.c.l.b16 %v585
      %v714 = vunpack.c.l.b16 %v586
      %v715 = vunpack.c.l.b16 %v587
      %v716 = vunpack.c.l.b16 %v588
      %v717 = vunpack.c.l.b16 %v589
      %v718 = vunpack.c.l.b16 %v590
      %v719 = vunpack.c.l.b16 %v591
      %v720 = vunpack.c.l.b16 %v592
      %v721 = vunpack.c.l.b16 %v593
      %v722 = vunpack.c.l.b16 %v594
      %v723 = vunpack.c.l.b16 %v595
      %v724 = vunpack.c.l.b16 %v596
      %v725 = vunpack.c.l.b16 %v597
      %v726 = vunpack.c.l.b16 %v598
      %v727 = vunpack.c.l.b16 %v599
      %v728 = vunpack.c.l.b16 %v600
      %v729 = vunpack.c.l.b16 %v601
      %v730 = vunpack.c.l.b16 %v602
      %v731 = vunpack.c.l.b16 %v603
      %v732 = vunpack.c.l.b16 %v604
      %v733 = vunpack.c.l.b16 %v605
      %v734 = vunpack.c.l.b16 %v606
      %v735 = vunpack.c.l.b16 %v607
      %v736 = vunpack.c.l.b16 %v608
      %v737 = vunpack.c.l.b16 %v609
      %v738 = vunpack.c.l.b16 %v610
      %v739 = vunpack.c.l.b16 %v611
      %v740 = vunpack.c.l.b16 %v612
      %v741 = vunpack.c.l.b16 %v613
      %v742 = vunpack.c.l.b16 %v614
      %v743 = vunpack.c.l.b16 %v615
      %v744 = vunpack.c.l.b16 %v616
      %v745 = vunpack.c.l.b16 %v617
      %v746 = vunpack.c.l.b16 %v618
      %v747 = vunpack.c.l.b16 %v619
      %v748 = vunpack.c.l.b16 %v620
      %v749 = vunpack.c.l.b16 %v621
      %v750 = vunpack.c.l.b16 %v622
      %v751 = vunpack.c.l.b16 %v623
      %v752 = vunpack.c.l.b16 %v624
      %v753 = vunpack.c.l.b16 %v625
      %v754 = vunpack.c.l.b16 %v626
      %v755 = vunpack.c.l.b16 %v627
      %v756 = vunpack.c.l.b16 %v628
      %v757 = vunpack.c.l.b16 %v629
      %v758 = vunpack.c.l.b16 %v630
      %v759 = vunpack.c.l.b16 %v631
      %v760 = vpack.c.b16 %v697, %v696
      %v761 = vpack.c.b16 %v699, %v698
      %v762 = vpack.c.b16 %v701, %v700
      %v763 = vpack.c.b16 %v703, %v702
      %v764 = vpack.c.b16 %v705, %v704
      %v765 = vpack.c.b16 %v707, %v706
      %v766 = vpack.c.b16 %v709, %v708
      %v767 = vpack.c.b16 %v711, %v710
      %v768 = vpack.c.b16 %v713, %v712
      %v769 = vpack.c.b16 %v715, %v714
      %v770 = vpack.c.b16 %v717, %v716
      %v771 = vpack.c.b16 %v719, %v718
      %v772 = vpack.c.b16 %v721, %v720
      %v773 = vpack.c.b16 %v723, %v722
      %v774 = vpack.c.b16 %v725, %v724
      %v775 = vpack.c.b16 %v727, %v726
      %v776 = vpack.c.b16 %v729, %v728
      %v777 = vpack.c.b16 %v731, %v730
      %v778 = vpack.c.b16 %v733, %v732
      %v779 = vpack.c.b16 %v735, %v734
      %v780 = vpack.c.b16 %v737, %v736
      %v781 = vpack.c.b16 %v739, %v738
      %v782 = vpack.c.b16 %v741, %v740
      %v783 = vpack.c.b16 %v743, %v742
      %v784 = vpack.c.b16 %v745, %v744
      %v785 = vpack.c.b16 %v747, %v746
      %v786 = vpack.c.b16 %v749, %v748
      %v787 = vpack.c.b16 %v751, %v750
      %v788 = vpack.c.b16 %v753, %v752
      %v789 = vpack.c.b16 %v755, %v754
      %v790 = vpack.c.b16 %v757, %v756
      %v791 = vpack.c.b16 %v759, %v758
      %824 = vmatprep.subr.bf16.mxu0 0
      %825 = vmatpush1.bf16.msra.mxu0 %v760
      %826 = vmatprep.subr.bf16.mxu0 0
      %827 = vmatpush1.bf16.msra.mxu0 %v761
      %828 = vmatprep.subr.bf16.mxu0 0
      %829 = vmatpush1.bf16.msra.mxu0 %v762
      %830 = vmatprep.subr.bf16.mxu0 0
      %831 = vmatpush1.bf16.msra.mxu0 %v763
      %832 = vmatprep.subr.bf16.mxu0 0
      %833 = vmatpush1.bf16.msra.mxu0 %v764
      %834 = vmatprep.subr.bf16.mxu0 0
      %835 = vmatpush1.bf16.msra.mxu0 %v765
      %836 = vmatprep.subr.bf16.mxu0 0
      %837 = vmatpush1.bf16.msra.mxu0 %v766
      %838 = vmatprep.subr.bf16.mxu0 0
      %839 = vmatpush1.bf16.msra.mxu0 %v767
      %840 = vmatprep.subr.bf16.mxu0 0
      %841 = vmatpush1.bf16.msra.mxu0 %v768
      %842 = vmatprep.subr.bf16.mxu0 0
      %843 = vmatpush1.bf16.msra.mxu0 %v769
      %844 = vmatprep.subr.bf16.mxu0 0
      %845 = vmatpush1.bf16.msra.mxu0 %v770
      %846 = vmatprep.subr.bf16.mxu0 0
      %847 = vmatpush1.bf16.msra.mxu0 %v771
      %848 = vmatprep.subr.bf16.mxu0 0
      %849 = vmatpush1.bf16.msra.mxu0 %v772
      %850 = vmatprep.subr.bf16.mxu0 0
      %851 = vmatpush1.bf16.msra.mxu0 %v773
      %852 = vmatprep.subr.bf16.mxu0 0
      %853 = vmatpush1.bf16.msra.mxu0 %v774
      %854 = vmatprep.subr.bf16.mxu0 0
      %855 = vmatpush1.bf16.msra.mxu0 %v775
      %856 = vmatprep.mubr.bf16.mxu0 %v565
      %857 = vmatmul.mubr.bf16.gmra.mrb[0].mxu0 %v564
      %v858 = vpop.f32.mrb[0].mxu0
      %v859 = vadd.f32 0.0, %v858
      %v860 = vpop.f32.mrb[0].mxu0
      %v861 = vpop.f32.mrb[0].mxu0
      %v862 = vpop.f32.mrb[0].mxu0
      %863 = vdwg.mxu0
      %864 = vmatprep.subr.bf16.mxu0 0
      %865 = vmatpush1.bf16.msra.mxu0 %v776
      %866 = vmatprep.subr.bf16.mxu0 0
      %867 = vmatpush1.bf16.msra.mxu0 %v777
      %868 = vmatprep.subr.bf16.mxu0 0
      %869 = vmatpush1.bf16.msra.mxu0 %v778
      %870 = vmatprep.subr.bf16.mxu0 0
      %871 = vmatpush1.bf16.msra.mxu0 %v779
      %872 = vmatprep.subr.bf16.mxu0 0
      %873 = vmatpush1.bf16.msra.mxu0 %v780
      %874 = vmatprep.subr.bf16.mxu0 0
      %875 = vmatpush1.bf16.msra.mxu0 %v781
      %876 = vmatprep.subr.bf16.mxu0 0
      %877 = vmatpush1.bf16.msra.mxu0 %v782
      %878 = vmatprep.subr.bf16.mxu0 0
      %879 = vmatpush1.bf16.msra.mxu0 %v783
      %880 = vmatprep.subr.bf16.mxu0 0
      %881 = vmatpush1.bf16.msra.mxu0 %v784
      %882 = vmatprep.subr.bf16.mxu0 0
      %883 = vmatpush1.bf16.msra.mxu0 %v785
      %884 = vmatprep.subr.bf16.mxu0 0
      %885 = vmatpush1.bf16.msra.mxu0 %v786
      %886 = vmatprep.subr.bf16.mxu0 0
      %887 = vmatpush1.bf16.msra.mxu0 %v787
      %888 = vmatprep.subr.bf16.mxu0 0
      %889 = vmatpush1.bf16.msra.mxu0 %v788
      %890 = vmatprep.subr.bf16.mxu0 0
      %891 = vmatpush1.bf16.msra.mxu0 %v789
      %892 = vmatprep.subr.bf16.mxu0 0
      %893 = vmatpush1.bf16.msra.mxu0 %v790
      %894 = vmatprep.subr.bf16.mxu0 0
      %895 = vmatpush1.bf16.msra.mxu0 %v791
      %896 = vmatprep.mubr.bf16.mxu0 %v567
      %897 = vmatmul.mubr.bf16.gmra.mrb[0].mxu0 %v566
      %v898 = vpop.f32.mrb[0].mxu0
      %v899 = vadd.f32 %v859, %v898
      %v900 = vpop.f32.mrb[0].mxu0
      %v901 = vpop.f32.mrb[0].mxu0
      %v902 = vpop.f32.mrb[0].mxu0
      %903 = vdwg.mxu0
      %904 = vst [vmem:[%s192] sm:$0xff] %v899
      %p905 = scmp.lt.s32.totalorder %s15, 1
      %s906 = scalar_select %p905, %s15, 1
      %s907 = smul.addr %s906, 8
      %s908 = scalar_lea.vmem %s4, %s907
      // Predicated region
      $region37: #{quadratic_forward.1} parent=35 // pred_check
        %p909 = pneg %p122
      $region38: #{quadratic_forward.1} parent=35 // pred_check_branch
        %911 = sbr.rel (%p909) target = $region40
      $region39: #{quadratic_forward.1} parent=35 // pred_region
        _
      $region40: #{quadratic_forward.1} parent=35 // pred_fallthru
        _
    $region36: #{quadratic_forward.1} parent=5 // pred_fallthru
      _
    %p912 = scmp.le.s32.totalorder 2, %s10
    // Predicated region
    $region41: #{quadratic_forward.1} parent=5 // pred_check
      %p913 = pneg %p912
    $region42: #{quadratic_forward.1} parent=5 // pred_check_branch
      %915 = sbr.rel (%p913) target = $region44
    $region43: #{quadratic_forward.1} parent=5 // pred_region
      %s916 = ssub.s32 %s10, 2
      // Predicated region
      $region45: #{quadratic_forward.1} parent=43 // pred_check
        %p917 = pneg %p128
      $region46: #{quadratic_forward.1} parent=43 // pred_check_branch
        %919 = sbr.rel (%p917) target = $region48
      $region47: #{quadratic_forward.1} parent=43 // pred_region
        %p920 = scmp.lt.s32.totalorder %s16, 1
        %s921 = scalar_select %p920, %s16, 1
        %s922 = smul.addr %s921, 8
        %s923 = scalar_lea.vmem %s4, %s922
      $region48: #{quadratic_forward.1} parent=43 // pred_fallthru
        _
    $region44: #{quadratic_forward.1} parent=5 // pred_fallthru
      _
  $region6: #{quadratic_forward.1} parent=0 // loop_footer
    %s14 = sadd.s32 1, %s10
  $region7: #{quadratic_forward.1} parent=0 // loop_footer_branch
    %9 = sbr.rel target = $region3
  $region8: #{quadratic_forward.1} parent=0 // loop_exit
    _

</llo_original>
